<compile_context>
chip_gen: v7x
topology: tpu7x:2x2x1
jax: 0.10.0
libtpu: 0.0.40
codegen_flags: <defaults>
</compile_context>

<pallas_src>
import functools

import jax
import jax.numpy as jnp
from jax import lax
from jax.experimental import pallas as pl
from jax.experimental.pallas import tpu as pltpu

EPS = 1e-8


def _feddecorr_kernel(x_ref, out_ref, g_acc, s_acc, mcol, icol, *,
                      n_rows, c_true, chunk_rows, needs_mask):
    step = pl.program_id(0)

    @pl.when(step == 0)
    def _():
        g_acc[...] = jnp.zeros_like(g_acc)
        s_acc[...] = jnp.zeros_like(s_acc)

    xt = x_ref[...]                              # (row_tile, Cp), native dtype
    if needs_mask:
        # Zero rows past the true batch size (handles the ragged last block
        # without a host-side padded copy of x; OOB DMA garbage never reaches
        # the accumulators).
        row_tile = x_ref.shape[0]
        gidx = step * row_tile + lax.broadcasted_iota(jnp.int32, xt.shape, 0)
        xt = jnp.where(gidx < n_rows, xt, jnp.zeros_like(xt))

    # Gram accumulation on the MXU; dim-0 contraction rides the transposed-LHS
    # operand path (no separate XLU transpose of the tile).
    g_acc[...] += lax.dot_general(
        xt, xt,
        dimension_numbers=(((0,), (0,)), ((), ())),
        preferred_element_type=jnp.float32,
    )
    s_acc[...] += jnp.sum(xt.astype(jnp.float32), axis=0, keepdims=True)

    @pl.when(step == pl.num_programs(0) - 1)
    def _():
        Cp = g_acc.shape[0]
        cr = chunk_rows
        n_chunks = Cp // cr
        n_f = jnp.float32(n_rows)

        mean = s_acc[...] * (1.0 / n_f)                      # (1, Cp)

        # Pass 0: recover colsum of squares as diag(G) (chunked, sublane-first
        # reduction keeps it on the VALUs).
        def diag_body(c, dacc):
            r0 = pl.multiple_of(c * cr, cr)
            g_blk = g_acc[pl.ds(r0, cr), :]                  # (cr, Cp)
            rid = r0 + lax.broadcasted_iota(jnp.int32, (cr, Cp), 0)
            cid = lax.broadcasted_iota(jnp.int32, (cr, Cp), 1)
            d = jnp.where(rid == cid, g_blk, 0.0)
            return dacc + jnp.sum(d, axis=0, keepdims=True)

        diag_g = lax.fori_loop(0, n_chunks, diag_body,
                               jnp.zeros((1, Cp), jnp.float32))

        var = (diag_g - n_f * mean * mean) * (1.0 / (n_f - 1.0))  # ddof=1
        inv = lax.rsqrt(EPS + var)                            # (1, Cp), EUP

        # Column-vector copies so row slices in the chunk loop are cheap
        # sublane-dim pl.ds reads (no per-chunk lane slicing / transposes).
        mcol[...] = mean.T                                    # (Cp, 1)
        icol[...] = inv.T                                     # (Cp, 1)

        # Pass 1: center, normalize, zero the diagonal, square, and reduce a
        # row chunk at a time -> bounded VMEM footprint even for large C.
        def corr_body(c, pacc):
            r0 = pl.multiple_of(c * cr, cr)
            g_blk = g_acc[pl.ds(r0, cr), :]                   # (cr, Cp)
            m_r = mcol[pl.ds(r0, cr), :]                      # (cr, 1)
            i_r = icol[pl.ds(r0, cr), :]                      # (cr, 1)
            gc = g_blk - n_f * (m_r * mean)
            corr = gc * (i_r * inv)
            rid = r0 + lax.broadcasted_iota(jnp.int32, (cr, Cp), 0)
            cid = lax.broadcasted_iota(jnp.int32, (cr, Cp), 1)
            corr = jnp.where(rid == cid, jnp.float32(0.0), corr)  # drop diag
            return pacc + jnp.sum(corr * corr, axis=0, keepdims=True)

        part = lax.fori_loop(0, n_chunks, corr_body,
                             jnp.zeros((1, Cp), jnp.float32))
        off_sum = jnp.sum(part)                               # one lane reduce

        denom = jnp.float32(c_true * (c_true - 1))
        out_ref[0, 0] = off_sum / denom / n_f


def feddecorr_loss(x, *, row_tile=None):
    """Pallas implementation of FedDecorrLoss.forward for x of shape (N, C)."""
    N, C = x.shape
    if N == 1:
        # Same semantics as the PyTorch module.
        return jnp.float32(0.0)

    itemsize = jnp.dtype(x.dtype).itemsize

    # Lane-pad the feature dim to a multiple of 128 (zero columns contribute
    # nothing to corr / diag; the true C is used for the divisor).
    Cp = ((C + 127) // 128) * 128
    if Cp != C:
        x = jnp.pad(x, ((0, 0), (0, Cp - C)))

    # Finalize chunk size (rows of the Gram processed per fori_loop step).
    cr = 256 if (Cp % 256 == 0) else 128

    # Generation-aware VMEM budgeting.
    try:
        info = pltpu.get_tpu_info()
        vmem_cap = int(getattr(info, "vmem_capacity_bytes", 0)) or (64 << 20)
    except Exception:  # pragma: no cover - conservative fallback
        vmem_cap = 64 << 20
    big_vmem = vmem_cap >= (96 << 20)           # v5e/v6e (128 MiB) vs v7x (64 MiB)
    limit_cap = (104 << 20) if big_vmem else max(vmem_cap - (10 << 20), 32 << 20)

    fixed = (Cp * Cp * 4                        # resident Gram accumulator
             + 8 * Cp * 4                       # (1, Cp) column-sum accumulator
             + 2 * Cp * 128 * 4                 # (Cp, 1) mean / inv columns
             + 4 * cr * Cp * 4)                 # finalize chunk temporaries
    headroom = 4 << 20

    if row_tile is None:
        # Big input slabs reach the HBM roofline; cap the double-buffered input
        # footprint per generation and never bother exceeding the batch size.
        target = (32 << 20) if big_vmem else (12 << 20)
        avail = limit_cap - fixed - headroom
        input_budget = max(min(avail, target), 2 << 20)
        row_tile = input_budget // (2 * Cp * itemsize)
    row_tile = max(8, (int(row_tile) // 8) * 8)
    row_tile = min(row_tile, max(8, ((N + 7) // 8) * 8))

    n_tiles = pl.cdiv(N, row_tile)
    needs_mask = (N % row_tile) != 0            # ragged last tile -> mask in-kernel

    vmem_limit = int(min(max(fixed + 2 * row_tile * Cp * itemsize + headroom,
                             32 << 20),
                         limit_cap))

    grid_spec = pltpu.PrefetchScalarGridSpec(
        num_scalar_prefetch=0,
        grid=(n_tiles,),
        in_specs=[pl.BlockSpec((row_tile, Cp), lambda i: (i, 0))],
        out_specs=pl.BlockSpec(memory_space=pltpu.SMEM),
        scratch_shapes=[
            pltpu.VMEM((Cp, Cp), jnp.float32),   # Gram accumulator
            pltpu.VMEM((1, Cp), jnp.float32),    # column sums
            pltpu.VMEM((Cp, 1), jnp.float32),    # mean as a column (finalize)
            pltpu.VMEM((Cp, 1), jnp.float32),    # inv-std as a column (finalize)
        ],
    )

    out = pl.pallas_call(
        functools.partial(_feddecorr_kernel, n_rows=N, c_true=C,
                          chunk_rows=cr, needs_mask=needs_mask),
        out_shape=jax.ShapeDtypeStruct((1, 1), jnp.float32),
        grid_spec=grid_spec,
        compiler_params=pltpu.CompilerParams(
            dimension_semantics=("arbitrary",),   # batch axis is a reduction
            vmem_limit_bytes=vmem_limit,
        ),
    )(x)
    return out[0, 0]


def _reference(x):
    # Pure-JAX reference mirroring the PyTorch code.
    N, C = x.shape
    x = x.astype(jnp.float32)
    x = x - jnp.mean(x, axis=0, keepdims=True)
    var = jnp.var(x, axis=0, keepdims=True, ddof=1)
    x = x / jnp.sqrt(EPS + var)
    corr = x.T @ x
    mask = ~jnp.eye(C, dtype=bool)
    return jnp.mean(corr[mask] ** 2) / N


if __name__ == "__main__":
    key = jax.random.PRNGKey(0)

    # Multi-step streaming path (grid of 4 row tiles), no host-side copies.
    N, C = 64, 128
    x = jax.random.normal(key, (N, C), dtype=jnp.float32)
    loss = feddecorr_loss(x, row_tile=16)
    jax.block_until_ready(loss)
    ref = _reference(x)
    assert jnp.allclose(loss, ref, rtol=1e-4, atol=1e-6), (loss, ref)

    # Ragged batch (in-kernel row masking) + narrow features (lane padding).
    x2 = jax.random.normal(jax.random.PRNGKey(1), (40, 32), dtype=jnp.float32)
    loss2 = feddecorr_loss(x2, row_tile=16)
    jax.block_until_ready(loss2)
    ref2 = _reference(x2)
    assert jnp.allclose(loss2, ref2, rtol=1e-4, atol=1e-6), (loss2, ref2)

    # Partial trailing block, C already lane-aligned: zero host-side copies.
    x3 = jax.random.normal(jax.random.PRNGKey(2), (37, 128), dtype=jnp.float32)
    loss3 = feddecorr_loss(x3, row_tile=16)
    jax.block_until_ready(loss3)
    ref3 = _reference(x3)
    assert jnp.allclose(loss3, ref3, rtol=1e-4, atol=1e-6), (loss3, ref3)

    # N == 1 guard matches the PyTorch module.
    assert float(feddecorr_loss(x[:1])) == 0.0

    print("KERNEL_OK")
</pallas_src>

<mosaic_0001>
module attributes {stable_mosaic.version = 11 : i64} {
  func.func @_feddecorr_kernel(%arg0: i32, %arg1: memref<16x128xf32, #tpu.memory_space<vmem>>, %arg2: memref<1x1xf32, #tpu.memory_space<smem>>, %arg3: memref<128x128xf32, #tpu.memory_space<vmem>>, %arg4: memref<1x128xf32, #tpu.memory_space<vmem>>, %arg5: memref<128x1xf32, #tpu.memory_space<vmem>>, %arg6: memref<128x1xf32, #tpu.memory_space<vmem>>) attributes {dimension_semantics = [#tpu.dimension_semantics<arbitrary>], iteration_bounds = array<i64: 4>, scalar_prefetch = 0 : i64, scratch_operands = 4 : i64, tpu.core_type = #tpu.core_type<tc>, window_params = [{transform_indices = @transform_0, window_bounds = array<i64: 16, 128>}, {transform_indices = @transform_1, window_bounds = array<i64: 1, 1>}]} {
    %c0_i32 = arith.constant 0 : i32
    %0 = arith.cmpi eq, %arg0, %c0_i32 : i32
    %1 = arith.extui %0 : i1 to i32
    %c0_i32_0 = arith.constant 0 : i32
    %2 = arith.cmpi ne, %1, %c0_i32_0 : i32
    scf.if %2 {
      %cst_12 = arith.constant 0.000000e+00 : f32
      %16 = vector.broadcast %cst_12 : f32 to vector<128x128xf32>
      %c0_13 = arith.constant 0 : index
      %c0_14 = arith.constant 0 : index
      %17 = vector.load %arg3[%c0_13, %c0_14] : memref<128x128xf32, #tpu.memory_space<vmem>>, vector<128x128xf32>
      tpu.vector_store %arg3[%c0_13, %c0_14], %16 {strides = array<i32>} : memref<128x128xf32, #tpu.memory_space<vmem>>, vector<128x128xf32>,
      %cst_15 = arith.constant 0.000000e+00 : f32
      %18 = vector.broadcast %cst_15 : f32 to vector<1x128xf32>
      %c0_16 = arith.constant 0 : index
      %c0_17 = arith.constant 0 : index
      %19 = vector.load %arg4[%c0_16, %c0_17] : memref<1x128xf32, #tpu.memory_space<vmem>>, vector<1x128xf32>
      tpu.vector_store %arg4[%c0_16, %c0_17], %18 {strides = array<i32>} : memref<1x128xf32, #tpu.memory_space<vmem>>, vector<1x128xf32>,
    } else {
    }
    %c0 = arith.constant 0 : index
    %c0_1 = arith.constant 0 : index
    %3 = vector.load %arg1[%c0, %c0_1] : memref<16x128xf32, #tpu.memory_space<vmem>>, vector<16x128xf32>
    %c0_2 = arith.constant 0 : index
    %c0_3 = arith.constant 0 : index
    %4 = vector.load %arg3[%c0_2, %c0_3] : memref<128x128xf32, #tpu.memory_space<vmem>>, vector<128x128xf32>
    %cst = arith.constant dense<0.000000e+00> : vector<128x128xf32>
    %5 = tpu.matmul %3, %3, %cst {dimension_numbers = #tpu.dot_dimension_numbers<[0], [0], [1], [1], [0, 1, 1, 1], [], []>} : vector<16x128xf32>, vector<16x128xf32>, vector<128x128xf32> -> vector<128x128xf32>
    %6 = arith.addf %4, %5 : vector<128x128xf32>
    %c0_4 = arith.constant 0 : index
    %c0_5 = arith.constant 0 : index
    %7 = vector.load %arg3[%c0_4, %c0_5] : memref<128x128xf32, #tpu.memory_space<vmem>>, vector<128x128xf32>
    tpu.vector_store %arg3[%c0_4, %c0_5], %6 {strides = array<i32>} : memref<128x128xf32, #tpu.memory_space<vmem>>, vector<128x128xf32>,
    %c0_6 = arith.constant 0 : index
    %c0_7 = arith.constant 0 : index
    %8 = vector.load %arg4[%c0_6, %c0_7] : memref<1x128xf32, #tpu.memory_space<vmem>>, vector<1x128xf32>
    %cst_8 = arith.constant dense<0.000000e+00> : vector<128xf32>
    %9 = vector.multi_reduction <add>, %3, %cst_8 [0] : vector<16x128xf32> to vector<128xf32>
    %10 = vector.shape_cast %9 : vector<128xf32> to vector<1x128xf32>
    %11 = arith.addf %8, %10 : vector<1x128xf32>
    %c0_9 = arith.constant 0 : index
    %c0_10 = arith.constant 0 : index
    %12 = vector.load %arg4[%c0_9, %c0_10] : memref<1x128xf32, #tpu.memory_space<vmem>>, vector<1x128xf32>
    tpu.vector_store %arg4[%c0_9, %c0_10], %11 {strides = array<i32>} : memref<1x128xf32, #tpu.memory_space<vmem>>, vector<1x128xf32>,
    %c3_i32 = arith.constant 3 : i32
    %13 = arith.cmpi eq, %arg0, %c3_i32 : i32
    %14 = arith.extui %13 : i1 to i32
    %c0_i32_11 = arith.constant 0 : i32
    %15 = arith.cmpi ne, %14, %c0_i32_11 : i32
    scf.if %15 {
      %c0_12 = arith.constant 0 : index
      %c0_13 = arith.constant 0 : index
      %16 = vector.load %arg4[%c0_12, %c0_13] : memref<1x128xf32, #tpu.memory_space<vmem>>, vector<1x128xf32>
      %cst_14 = arith.constant 1.000000e+00 : f32
      %cst_15 = arith.constant 6.400000e+01 : f32
      %17 = arith.divf %cst_14, %cst_15 : f32
      %18 = vector.broadcast %17 : f32 to vector<1x128xf32>
      %19 = arith.mulf %16, %18 : vector<1x128xf32>
      %cst_16 = arith.constant 0.000000e+00 : f32
      %20 = vector.broadcast %cst_16 : f32 to vector<1x128xf32>
      %c0_i32_17 = arith.constant 0 : i32
      %c128_i32 = arith.constant 128 : i32
      %21 = arith.muli %c0_i32_17, %c128_i32 : i32
      %22 = tpu.assume_multiple %21, 128 : i32
      %23 = arith.index_cast %22 : i32 to index
      %c0_18 = arith.constant 0 : index
      %24 = vector.load %arg3[%23, %c0_18] : memref<128x128xf32, #tpu.memory_space<vmem>>, vector<128x128xf32>
      %25 = tpu.iota {dimensions = array<i32: 0>} : vector<128x128xi32>
      %26 = vector.broadcast %22 : i32 to vector<128x128xi32>
      %27 = arith.addi %26, %25 : vector<128x128xi32>
      %28 = tpu.iota {dimensions = array<i32: 1>} : vector<128x128xi32>
      %29 = arith.cmpi eq, %27, %28 : vector<128x128xi32>
      %cst_19 = arith.constant 0.000000e+00 : f32
      %30 = vector.broadcast %cst_19 : f32 to vector<128x128xf32>
      %31 = arith.select %29, %24, %30 : vector<128x128xi1>, vector<128x128xf32>
      %cst_20 = arith.constant dense<0.000000e+00> : vector<128xf32>
      %32 = vector.multi_reduction <add>, %31, %cst_20 [0] : vector<128x128xf32> to vector<128xf32>
      %33 = vector.shape_cast %32 : vector<128xf32> to vector<1x128xf32>
      %34 = arith.addf %20, %33 : vector<1x128xf32>
      %c1_i32 = arith.constant 1 : i32
      %cst_21 = arith.constant 6.400000e+01 : f32
      %35 = vector.broadcast %cst_21 : f32 to vector<1x128xf32>
      %36 = arith.mulf %35, %19 : vector<1x128xf32>
      %37 = arith.mulf %36, %19 : vector<1x128xf32>
      %38 = arith.subf %34, %37 : vector<1x128xf32>
      %cst_22 = arith.constant 6.400000e+01 : f32
      %cst_23 = arith.constant 1.000000e+00 : f32
      %39 = arith.subf %cst_22, %cst_23 : f32
      %cst_24 = arith.constant 1.000000e+00 : f32
      %40 = arith.divf %cst_24, %39 : f32
      %41 = vector.broadcast %40 : f32 to vector<1x128xf32>
      %42 = arith.mulf %38, %41 : vector<1x128xf32>
      %cst_25 = arith.constant 9.99999993E-9 : f32
      %43 = vector.broadcast %cst_25 : f32 to vector<1x128xf32>
      %44 = arith.addf %43, %42 : vector<1x128xf32>
      %45 = math.rsqrt %44 : vector<1x128xf32>
      %46 = tpu.transpose %19, [1, 0] : vector<1x128xf32> -> vector<128x1xf32>
      %c0_26 = arith.constant 0 : index
      %c0_27 = arith.constant 0 : index
      %47 = vector.load %arg5[%c0_26, %c0_27] : memref<128x1xf32, #tpu.memory_space<vmem>>, vector<128x1xf32>
      tpu.vector_store %arg5[%c0_26, %c0_27], %46 {strides = array<i32>} : memref<128x1xf32, #tpu.memory_space<vmem>>, vector<128x1xf32>,
      %48 = tpu.transpose %45, [1, 0] : vector<1x128xf32> -> vector<128x1xf32>
      %c0_28 = arith.constant 0 : index
      %c0_29 = arith.constant 0 : index
      %49 = vector.load %arg6[%c0_28, %c0_29] : memref<128x1xf32, #tpu.memory_space<vmem>>, vector<128x1xf32>
      tpu.vector_store %arg6[%c0_28, %c0_29], %48 {strides = array<i32>} : memref<128x1xf32, #tpu.memory_space<vmem>>, vector<128x1xf32>,
      %cst_30 = arith.constant 0.000000e+00 : f32
      %50 = vector.broadcast %cst_30 : f32 to vector<1x128xf32>
      %cst_31 = arith.constant 6.400000e+01 : f32
      %c0_i32_32 = arith.constant 0 : i32
      %c128_i32_33 = arith.constant 128 : i32
      %51 = arith.muli %c0_i32_32, %c128_i32_33 : i32
      %52 = tpu.assume_multiple %51, 128 : i32
      %53 = arith.index_cast %52 : i32 to index
      %c0_34 = arith.constant 0 : index
      %54 = vector.load %arg3[%53, %c0_34] : memref<128x128xf32, #tpu.memory_space<vmem>>, vector<128x128xf32>
      %55 = arith.index_cast %52 : i32 to index
      %c0_35 = arith.constant 0 : index
      %56 = vector.load %arg5[%55, %c0_35] : memref<128x1xf32, #tpu.memory_space<vmem>>, vector<128x1xf32>
      %57 = arith.index_cast %52 : i32 to index
      %c0_36 = arith.constant 0 : index
      %58 = vector.load %arg6[%57, %c0_36] : memref<128x1xf32, #tpu.memory_space<vmem>>, vector<128x1xf32>
      %59 = vector.broadcast %56 : vector<128x1xf32> to vector<128x128xf32>
      %60 = vector.broadcast %19 : vector<1x128xf32> to vector<128x128xf32>
      %61 = arith.mulf %59, %60 : vector<128x128xf32>
      %62 = vector.broadcast %cst_31 : f32 to vector<128x128xf32>
      %63 = arith.mulf %62, %61 : vector<128x128xf32>
      %64 = arith.subf %54, %63 : vector<128x128xf32>
      %65 = vector.broadcast %58 : vector<128x1xf32> to vector<128x128xf32>
      %66 = vector.broadcast %45 : vector<1x128xf32> to vector<128x128xf32>
      %67 = arith.mulf %65, %66 : vector<128x128xf32>
      %68 = arith.mulf %64, %67 : vector<128x128xf32>
      %69 = tpu.iota {dimensions = array<i32: 0>} : vector<128x128xi32>
      %70 = vector.broadcast %52 : i32 to vector<128x128xi32>
      %71 = arith.addi %70, %69 : vector<128x128xi32>
      %72 = tpu.iota {dimensions = array<i32: 1>} : vector<128x128xi32>
      %73 = arith.cmpi eq, %71, %72 : vector<128x128xi32>
      %cst_37 = arith.constant 0.000000e+00 : f32
      %74 = vector.broadcast %cst_37 : f32 to vector<128x128xf32>
      %75 = arith.select %73, %74, %68 : vector<128x128xi1>, vector<128x128xf32>
      %76 = arith.mulf %75, %75 : vector<128x128xf32>
      %cst_38 = arith.constant dense<0.000000e+00> : vector<128xf32>
      %77 = vector.multi_reduction <add>, %76, %cst_38 [0] : vector<128x128xf32> to vector<128xf32>
      %78 = vector.shape_cast %77 : vector<128xf32> to vector<1x128xf32>
      %79 = arith.addf %50, %78 : vector<1x128xf32>
      %c1_i32_39 = arith.constant 1 : i32
      %80 = vector.shape_cast %79 : vector<1x128xf32> to vector<1x1x128xf32>
      %cst_40 = arith.constant dense<0.000000e+00> : vector<1xf32>
      %81 = vector.multi_reduction <add>, %80, %cst_40 [1, 2] : vector<1x1x128xf32> to vector<1xf32>
      %82 = vector.shape_cast %81 : vector<1xf32> to vector<1x1x1xf32>
      %83 = vector.extract %82[0, 0, 0] : f32 from vector<1x1x1xf32>
      %cst_41 = arith.constant 1.625600e+04 : f32
      %84 = arith.divf %83, %cst_41 : f32
      %cst_42 = arith.constant 6.400000e+01 : f32
      %85 = arith.divf %84, %cst_42 : f32
      %c0_43 = arith.constant 0 : index
      %c0_44 = arith.constant 0 : index
      %86 = memref.load %arg2[%c0_43, %c0_44] : memref<1x1xf32, #tpu.memory_space<smem>>
      memref.store %85, %arg2[%c0_43, %c0_44] : memref<1x1xf32, #tpu.memory_space<smem>>
    } else {
    }
    return
  }
  func.func @transform_0(%arg0: i32) -> (i32, i32) {
    %c0_i32 = arith.constant 0 : i32
    %c0_i32_0 = arith.constant 0 : i32
    return %arg0, %c0_i32 : i32, i32
  }
  func.func @transform_1(%arg0: i32) -> (i32, i32) {
    %c0_i32 = arith.constant 0 : i32
    %c0_i32_0 = arith.constant 0 : i32
    %c0_i32_1 = arith.constant 0 : i32
    return %c0_i32, %c0_i32_0 : i32, i32
  }
}

</mosaic_0001>

<llo_original>
// kernel: tpu_custom_call.1
$region0: #{tpu_custom_call.1}
  #allocation0 [shape = 'u32[]', space=smem, size = 0x4, offset = 0x4, fixed_abs, tag = 'smem constant byte address 0x4 - core index']
  #allocation1 [shape = 'u32[144,128]{1,0:T(1,128)}', space=vmem, size = 0x12000, scoped, tag = 'internal scratch']
  #allocation2 [shape = 'f32[128,128]{1,0:T(8,128)}', space=vmem, size = 0x10000, scoped, tag = 'scratch operand']
  #allocation3 [shape = 'f32[1,128]{1,0:T(1,128)}', space=vmem, size = 0x200, scoped, tag = 'scratch operand']
  #allocation4 [shape = 'f32[128,1]{1,0:T(8,128)}', space=vmem, size = 0x10000, scoped, tag = 'scratch operand']
  #allocation5 [shape = 'f32[128,1]{1,0:T(8,128)}', space=vmem, size = 0x10000, scoped, tag = 'scratch operand']
  %s0 = inlined_call_operand.hbm [shape: f32[64,128], index: 0, kind: input, shape index: {}]
  %s1 = inlined_call_operand.hbm [shape: f32[1,1], index: 1, kind: output, shape index: {}]
  %s2 = sld [smem:[#allocation0]]
  $region49: #{tpu_custom_call.1} parent=0
    _
  %s4 = ssub.s32 1, %s2
  %s5 = scalar_select 0, %s4, %s2
  $region1: #{tpu_custom_call.1} parent=0
    #allocation6 [shape = 'u8[16384]{0}', space=vmem, size = 0x4000, scoped, tag = 'input window, operand 0']
    #allocation7 [shape = 's32[2]{0}', space=sflag, size = 0x8, scoped, tag = 'scoped memory for tpu_custom_call.1']
    #allocation8 [shape = 's32[2]{0}', space=sflag, size = 0x8, scoped, tag = 'scoped memory for tpu_custom_call.1']
    #allocation9 [shape = 'u8[512]{0}', space=smem, size = 0x200, scoped, tag = 'output window, operand 0, single buffered']
    %6 = vsyncpa [#allocation7], 0
    %s7 = scalar_lea.sflag [#allocation7], 1
    %8 = vsyncpa %s7, 0
    %9 = vsyncpa [#allocation8], 0
    loop: start=0, step=1, limit=6
    $region2: #{tpu_custom_call.1} parent=1 // loop_pre_header
      _
    $region3: #{tpu_custom_call.1} parent=1 // loop_header
      %s11 = sphi 0, %s15
      %p12 = scmp.ge.s32.totalorder %s11, 6
      %s21 = sphi 0, %s23
      %s24 = sphi 0, %s21
      %s25 = sphi 0, %s24
      %s41 = sphi 0, %s25
      %s45 = sphi 0, %s45
      %s47 = sphi 0, %s45
      %s48 = sphi 0, %s47
      %s62 = sphi 0, %s48
    $region4: #{tpu_custom_call.1} parent=1 // loop_header_branch
      %14 = sbr.rel (%p12) target = $region8
    $region5: #{tpu_custom_call.1} parent=1 // loop_body
      %s16 = ssub.s32 %s11, 1
      %s17 = ssub.s32 %s11, 2
      %s18 = sadd.s32 %s11, 1
      %s19 = ssub.s32 %s11, %s18
      %p20 = scmp.eq.s32.totalorder %s19, 0
      %s22 = sadd.s32 %s21, 1
      %s23 = scalar_select %p20, %s21, %s22
      %p26 = pneg %p20
      %p27 = scmp.eq.s32.totalorder %s11, 3
      %p28 = por %p26, %p27
      %p29 = scmp.ne.s32.totalorder %s21, %s24
      %p30 = scmp.eq.s32.totalorder %s11, 0
      %p31 = por %p29, %p30
      %p32 = scmp.ne.s32.totalorder %s21, %s24
      %p33 = scmp.eq.s32.totalorder %s16, 3
      %p34 = por %p32, %p33
      %p35 = scmp.ne.s32.totalorder %s24, %s25
      %p36 = scmp.eq.s32.totalorder %s16, 0
      %p37 = por %p35, %p36
      %p38 = scmp.ne.s32.totalorder %s24, %s25
      %p39 = scmp.eq.s32.totalorder %s17, 3
      %p40 = por %p38, %p39
      %p42 = scmp.ne.s32.totalorder %s25, %s41
      %p43 = scmp.eq.s32.totalorder %s17, 0
      %p44 = por %p42, %p43
      %s46 = sadd.s32 %s45, 1
      %p49 = scmp.eq.s32.totalorder %s11, 3
      %p50 = scmp.ne.s32.totalorder %s45, %s47
      %p51 = scmp.eq.s32.totalorder %s11, 0
      %p52 = por %p50, %p51
      %p53 = scmp.ne.s32.totalorder %s45, %s47
      %p54 = scmp.eq.s32.totalorder %s16, 3
      %p55 = por %p53, %p54
      %p56 = scmp.ne.s32.totalorder %s47, %s48
      %p57 = scmp.eq.s32.totalorder %s16, 0
      %p58 = por %p56, %p57
      %p59 = scmp.ne.s32.totalorder %s47, %s48
      %p60 = scmp.eq.s32.totalorder %s17, 3
      %p61 = por %p59, %p60
      %p63 = scmp.ne.s32.totalorder %s48, %s62
      %p64 = scmp.eq.s32.totalorder %s17, 0
      %p65 = por %p63, %p64
      %p66 = scmp.le.s32.totalorder 1, %s11
      %p67 = scmp.lt.s32.totalorder %s11, 5
      %p68 = pnand %p66, %p67
      %p69 = pneg %p68
      // Predicated region
      $region9: #{tpu_custom_call.1} parent=5 // pred_check
        _
      $region10: #{tpu_custom_call.1} parent=5 // pred_check_branch
        %71 = sbr.rel (%p68) target = $region12
      $region11: #{tpu_custom_call.1} parent=5 // pred_region
        %s72 = ssub.s32 %s11, 1
      $region12: #{tpu_custom_call.1} parent=5 // pred_fallthru
        _
      %p73 = scmp.lt.s32.totalorder %s11, 4
      // Predicated region
      $region13: #{tpu_custom_call.1} parent=5 // pred_check
        %p74 = pneg %p73
      $region14: #{tpu_custom_call.1} parent=5 // pred_check_branch
        %76 = sbr.rel (%p74) target = $region16
      $region15: #{tpu_custom_call.1} parent=5 // pred_region
        // Predicated region
        $region17: #{tpu_custom_call.1} parent=15 // pred_check
          %p77 = pneg %p31
        $region18: #{tpu_custom_call.1} parent=15 // pred_check_branch
          %79 = sbr.rel (%p77) target = $region20
        $region19: #{tpu_custom_call.1} parent=15 // pred_region
          %s80 = sand.u32 %s21, 1
          %s81 = scalar_lea.sflag [#allocation7], %s80
          %s82 = sand.u32 %s21, 1
          %s83 = smul.addr %s82, 16
          %s84 = scalar_lea.vmem [#allocation6], %s83
          %s85 = smul.u32 2, %s11
          %s87 = ssub.s32 256, 256
          %88 = vsyncadd %s81, %s87
          %s89 = smul.addr %s85, 128
          %s90 = scalar_lea.hbm %s0, %s89
          %s91 = sshll.u32 %s84, 4
          %s92 = int_to_ptr.vmem [resolvable:$true] %s91
          %97 = dma.hbm_to_vmem [thread:$0]  %s90, 256, %s92, %s81, 128, 128, 8
        $region20: #{tpu_custom_call.1} parent=15 // pred_fallthru
          _
      $region16: #{tpu_custom_call.1} parent=5 // pred_fallthru
        _
      %p98 = scmp.le.s32.totalorder 1, %s11
      %p99 = scmp.lt.s32.totalorder %s11, 5
      %p100 = pnand %p98, %p99
      %p101 = pneg %p100
      // Predicated region
      $region21: #{tpu_custom_call.1} parent=5 // pred_check
        _
      $region22: #{tpu_custom_call.1} parent=5 // pred_check_branch
        %103 = sbr.rel (%p100) target = $region24
      $region23: #{tpu_custom_call.1} parent=5 // pred_region
        %s104 = ssub.s32 %s11, 1
        %s105 = sand.u32 %s24, 1
        %s106 = scalar_lea.sflag [#allocation7], %s105
        %s107 = sand.u32 %s24, 1
        %s108 = smul.addr %s107, 16
        %s109 = scalar_lea.vmem [#allocation6], %s108
        // Predicated region
        $region25: #{tpu_custom_call.1} parent=23 // pred_check
          %p110 = pneg %p37
        $region26: #{tpu_custom_call.1} parent=23 // pred_check_branch
          %112 = sbr.rel (%p110) target = $region28
        $region27: #{tpu_custom_call.1} parent=23 // pred_region
          %113 = dma.done %s106, 256
        $region28: #{tpu_custom_call.1} parent=23 // pred_fallthru
          _
        %s114 = sand.u32 %s24, 1
        %s115 = scalar_lea.sflag [#allocation7], %s114
        %s116 = sand.u32 %s24, 1
        %s117 = smul.addr %s116, 16
        %s118 = scalar_lea.vmem [#allocation6], %s117
        %p119 = pneg %p37
        %p120 = pneg %p34
        %p121 = pneg %p58
        %p122 = pneg %p55
        %s123 = smul.u32 2, %s16
        %p124 = scmp.eq.s32.totalorder %s16, 0
        // Predicated region
        $region29: #{tpu_custom_call.1} parent=23 // pred_check
          %p125 = pneg %p124
        $region30: #{tpu_custom_call.1} parent=23 // pred_check_branch
          %127 = sbr.rel (%p125) target = $region32
        $region31: #{tpu_custom_call.1} parent=23 // pred_region
          %128 = vst [vmem:[#allocation2] sm:$0xff] 0.0
          %129 = vst [vmem:[#allocation2 + $0x8] sm:$0xff] 0.0
          %130 = vst [vmem:[#allocation2 + $0x10] sm:$0xff] 0.0
          %131 = vst [vmem:[#allocation2 + $0x18] sm:$0xff] 0.0
          %132 = vst [vmem:[#allocation2 + $0x20] sm:$0xff] 0.0
          %133 = vst [vmem:[#allocation2 + $0x28] sm:$0xff] 0.0
          %134 = vst [vmem:[#allocation2 + $0x30] sm:$0xff] 0.0
          %135 = vst [vmem:[#allocation2 + $0x38] sm:$0xff] 0.0
          %136 = vst [vmem:[#allocation2 + $0x40] sm:$0xff] 0.0
          %137 = vst [vmem:[#allocation2 + $0x48] sm:$0xff] 0.0
          %138 = vst [vmem:[#allocation2 + $0x50] sm:$0xff] 0.0
          %139 = vst [vmem:[#allocation2 + $0x58] sm:$0xff] 0.0
          %140 = vst [vmem:[#allocation2 + $0x60] sm:$0xff] 0.0
          %141 = vst [vmem:[#allocation2 + $0x68] sm:$0xff] 0.0
          %142 = vst [vmem:[#allocation2 + $0x70] sm:$0xff] 0.0
          %143 = vst [vmem:[#allocation2 + $0x78] sm:$0xff] 0.0
          %144 = vst [vmem:[#allocation3] sm:$0x1] 0.0
        $region32: #{tpu_custom_call.1} parent=23 // pred_fallthru
          _
        %v145 = vld [vmem:[%s109] sm:$0xff]
        %v146 = vld [vmem:[%s109 + $0x8] sm:$0xff]
        %v147 = vld [vmem:[#allocation2] sm:$0xff]
        %v148 = vld [vmem:[#allocation2 + $0x8] sm:$0xff]
        %v149 = vld [vmem:[#allocation2 + $0x10] sm:$0xff]
        %v150 = vld [vmem:[#allocation2 + $0x18] sm:$0xff]
        %v151 = vld [vmem:[#allocation2 + $0x20] sm:$0xff]
        %v152 = vld [vmem:[#allocation2 + $0x28] sm:$0xff]
        %v153 = vld [vmem:[#allocation2 + $0x30] sm:$0xff]
        %v154 = vld [vmem:[#allocation2 + $0x38] sm:$0xff]
        %v155 = vld [vmem:[#allocation2 + $0x40] sm:$0xff]
        %v156 = vld [vmem:[#allocation2 + $0x48] sm:$0xff]
        %v157 = vld [vmem:[#allocation2 + $0x50] sm:$0xff]
        %v158 = vld [vmem:[#allocation2 + $0x58] sm:$0xff]
        %v159 = vld [vmem:[#allocation2 + $0x60] sm:$0xff]
        %v160 = vld [vmem:[#allocation2 + $0x68] sm:$0xff]
        %v161 = vld [vmem:[#allocation2 + $0x70] sm:$0xff]
        %v162 = vld [vmem:[#allocation2 + $0x78] sm:$0xff]
        %163 = vxpose.xlu0.b32.start [1/16] %v145, 128
        %164 = vxpose.xlu0.b32.cont [2/16] %v146, 128
        %165 = vxpose.xlu0.b32.cont [3/16] 0.0, 128
        %166 = vxpose.xlu0.b32.cont [4/16] 0.0, 128
        %167 = vxpose.xlu0.b32.cont [5/16] 0.0, 128
        %168 = vxpose.xlu0.b32.cont [6/16] 0.0, 128
        %169 = vxpose.xlu0.b32.cont [7/16] 0.0, 128
        %170 = vxpose.xlu0.b32.cont [8/16] 0.0, 128
        %171 = vxpose.xlu0.b32.cont [9/16] 0.0, 128
        %172 = vxpose.xlu0.b32.cont [10/16] 0.0, 128
        %173 = vxpose.xlu0.b32.cont [11/16] 0.0, 128
        %174 = vxpose.xlu0.b32.cont [12/16] 0.0, 128
        %175 = vxpose.xlu0.b32.cont [13/16] 0.0, 128
        %176 = vxpose.xlu0.b32.cont [14/16] 0.0, 128
        %177 = vxpose.xlu0.b32.cont [15/16] 0.0, 128
        %178 = vxpose.xlu0.b32.end [16/16] 0.0, 128
        %v179 = vpop.trf.xlu0
        %v180 = vpop.trf.xlu0
        %v181 = vpop.trf.xlu0
        %v182 = vpop.trf.xlu0
        %v183 = vpop.trf.xlu0
        %v184 = vpop.trf.xlu0
        %v185 = vpop.trf.xlu0
        %v186 = vpop.trf.xlu0
        %v187 = vpop.trf.xlu0
        %v188 = vpop.trf.xlu0
        %v189 = vpop.trf.xlu0
        %v190 = vpop.trf.xlu0
        %v191 = vpop.trf.xlu0
        %v192 = vpop.trf.xlu0
        %v193 = vpop.trf.xlu0
        %v194 = vpop.trf.xlu0
        %vm195 = vcmask 130048
        %v197 = vsel %vm195, %v179, 0
        %v200 = vsel %vm195, %v180, 0
        %v203 = vsel %vm195, %v181, 0
        %v206 = vsel %vm195, %v182, 0
        %v209 = vsel %vm195, %v183, 0
        %v212 = vsel %vm195, %v184, 0
        %v215 = vsel %vm195, %v185, 0
        %v218 = vsel %vm195, %v186, 0
        %v221 = vsel %vm195, %v187, 0
        %v224 = vsel %vm195, %v188, 0
        %v227 = vsel %vm195, %v189, 0
        %v230 = vsel %vm195, %v190, 0
        %v233 = vsel %vm195, %v191, 0
        %v236 = vsel %vm195, %v192, 0
        %v239 = vsel %vm195, %v193, 0
        %v242 = vsel %vm195, %v194, 0
        %244 = vmatprep.subr.mxu0 0.0
        %245 = vmatpush1.msra.mxu0 %v145
        %246 = vmatprep.subr.mxu0 0.0
        %247 = vmatpush1.msra.mxu0 %v146
        %248 = vmatprep.subr.mxu0 0.0
        %249 = vmatpush1.msra.mxu0 0.0
        %250 = vmatprep.subr.mxu0 0.0
        %251 = vmatpush1.msra.mxu0 0.0
        %252 = vmatprep.subr.mxu0 0.0
        %253 = vmatpush1.msra.mxu0 0.0
        %254 = vmatprep.subr.mxu0 0.0
        %255 = vmatpush1.msra.mxu0 0.0
        %256 = vmatprep.subr.mxu0 0.0
        %257 = vmatpush1.msra.mxu0 0.0
        %258 = vmatprep.subr.mxu0 0.0
        %259 = vmatpush1.msra.mxu0 0.0
        %260 = vmatprep.subr.mxu0 0.0
        %261 = vmatpush1.msra.mxu0 0.0
        %262 = vmatprep.subr.mxu0 0.0
        %263 = vmatpush1.msra.mxu0 0.0
        %264 = vmatprep.subr.mxu0 0.0
        %265 = vmatpush1.msra.mxu0 0.0
        %266 = vmatprep.subr.mxu0 0.0
        %267 = vmatpush1.msra.mxu0 0.0
        %268 = vmatprep.subr.mxu0 0.0
        %269 = vmatpush1.msra.mxu0 0.0
        %270 = vmatprep.subr.mxu0 0.0
        %271 = vmatpush1.msra.mxu0 0.0
        %272 = vmatprep.subr.mxu0 0.0
        %273 = vmatpush1.msra.mxu0 0.0
        %274 = vmatprep.subr.mxu0 0.0
        %275 = vmatpush1.msra.mxu0 0.0
        %276 = vmatprep.subr.mxu0 0.0
        %277 = vmatpush1.msra.mxu0 0.0
        %278 = vmatprep.subr.mxu0 0.0
        %279 = vmatpush1.msra.mxu0 0.0
        %280 = vmatprep.subr.mxu0 0.0
        %281 = vmatpush1.msra.mxu0 0.0
        %282 = vmatprep.subr.mxu0 0.0
        %283 = vmatpush1.msra.mxu0 0.0
        %284 = vmatprep.subr.mxu0 0.0
        %285 = vmatpush1.msra.mxu0 0.0
        %286 = vmatprep.subr.mxu0 0.0
        %287 = vmatpush1.msra.mxu0 0.0
        %288 = vmatprep.subr.mxu0 0.0
        %289 = vmatpush1.msra.mxu0 0.0
        %290 = vmatprep.subr.mxu0 0.0
        %291 = vmatpush1.msra.mxu0 0.0
        %292 = vmatprep.subr.mxu0 0.0
        %293 = vmatpush1.msra.mxu0 0.0
        %294 = vmatprep.subr.mxu0 0.0
        %295 = vmatpush1.msra.mxu0 0.0
        %296 = vmatprep.subr.mxu0 0.0
        %297 = vmatpush1.msra.mxu0 0.0
        %298 = vmatprep.subr.mxu0 0.0
        %299 = vmatpush1.msra.mxu0 0.0
        %300 = vmatprep.subr.mxu0 0.0
        %301 = vmatpush1.msra.mxu0 0.0
        %302 = vmatprep.subr.mxu0 0.0
        %303 = vmatpush1.msra.mxu0 0.0
        %304 = vmatprep.subr.mxu0 0.0
        %305 = vmatpush1.msra.mxu0 0.0
        %306 = vmatprep.subr.mxu0 0.0
        %307 = vmatpush1.msra.mxu0 0.0
        %308 = vmatprep.mubr.f32.mxu0 0.0
        %309 = vmatmul.mubr.f32.gmra.mrb[0].mxu0 %v197
        %v310 = vpop.f32.mrb[0].mxu0
        %v311 = vadd.f32 0.0, %v310
        %v312 = vpop.f32.mrb[0].mxu0
        %313 = vmatprep.mubr.f32.mxu0 0.0
        %314 = vmatmul.mubr.f32.gmra.mrb[0].mxu0 %v200
        %v315 = vpop.f32.mrb[0].mxu0
        %v316 = vadd.f32 0.0, %v315
        %v317 = vpop.f32.mrb[0].mxu0
        %318 = vmatprep.mubr.f32.mxu0 0.0
        %319 = vmatmul.mubr.f32.gmra.mrb[0].mxu0 %v203
        %v320 = vpop.f32.mrb[0].mxu0
        %v321 = vadd.f32 0.0, %v320
        %v322 = vpop.f32.mrb[0].mxu0
        %323 = vmatprep.mubr.f32.mxu0 0.0
        %324 = vmatmul.mubr.f32.gmra.mrb[0].mxu0 %v206
        %v325 = vpop.f32.mrb[0].mxu0
        %v326 = vadd.f32 0.0, %v325
        %v327 = vpop.f32.mrb[0].mxu0
        %328 = vmatprep.mubr.f32.mxu0 0.0
        %329 = vmatmul.mubr.f32.gmra.mrb[0].mxu0 %v209
        %v330 = vpop.f32.mrb[0].mxu0
        %v331 = vadd.f32 0.0, %v330
        %v332 = vpop.f32.mrb[0].mxu0
        %333 = vmatprep.mubr.f32.mxu0 0.0
        %334 = vmatmul.mubr.f32.gmra.mrb[0].mxu0 %v212
        %v335 = vpop.f32.mrb[0].mxu0
        %v336 = vadd.f32 0.0, %v335
        %v337 = vpop.f32.mrb[0].mxu0
        %338 = vmatprep.mubr.f32.mxu0 0.0
        %339 = vmatmul.mubr.f32.gmra.mrb[0].mxu0 %v215
        %v340 = vpop.f32.mrb[0].mxu0
        %v341 = vadd.f32 0.0, %v340
        %v342 = vpop.f32.mrb[0].mxu0
        %343 = vmatprep.mubr.f32.mxu0 0.0
        %344 = vmatmul.mubr.f32.gmra.mrb[0].mxu0 %v218
        %v345 = vpop.f32.mrb[0].mxu0
        %v346 = vadd.f32 0.0, %v345
        %v347 = vpop.f32.mrb[0].mxu0
        %348 = vmatprep.mubr.f32.mxu0 0.0
        %349 = vmatmul.mubr.f32.gmra.mrb[0].mxu0 %v221
        %v350 = vpop.f32.mrb[0].mxu0
        %v351 = vadd.f32 0.0, %v350
        %v352 = vpop.f32.mrb[0].mxu0
        %353 = vmatprep.mubr.f32.mxu0 0.0
        %354 = vmatmul.mubr.f32.gmra.mrb[0].mxu0 %v224
        %v355 = vpop.f32.mrb[0].mxu0
        %v356 = vadd.f32 0.0, %v355
        %v357 = vpop.f32.mrb[0].mxu0
        %358 = vmatprep.mubr.f32.mxu0 0.0
        %359 = vmatmul.mubr.f32.gmra.mrb[0].mxu0 %v227
        %v360 = vpop.f32.mrb[0].mxu0
        %v361 = vadd.f32 0.0, %v360
        %v362 = vpop.f32.mrb[0].mxu0
        %363 = vmatprep.mubr.f32.mxu0 0.0
        %364 = vmatmul.mubr.f32.gmra.mrb[0].mxu0 %v230
        %v365 = vpop.f32.mrb[0].mxu0
        %v366 = vadd.f32 0.0, %v365
        %v367 = vpop.f32.mrb[0].mxu0
        %368 = vmatprep.mubr.f32.mxu0 0.0
        %369 = vmatmul.mubr.f32.gmra.mrb[0].mxu0 %v233
        %v370 = vpop.f32.mrb[0].mxu0
        %v371 = vadd.f32 0.0, %v370
        %v372 = vpop.f32.mrb[0].mxu0
        %373 = vmatprep.mubr.f32.mxu0 0.0
        %374 = vmatmul.mubr.f32.gmra.mrb[0].mxu0 %v236
        %v375 = vpop.f32.mrb[0].mxu0
        %v376 = vadd.f32 0.0, %v375
        %v377 = vpop.f32.mrb[0].mxu0
        %378 = vmatprep.mubr.f32.mxu0 0.0
        %379 = vmatmul.mubr.f32.gmra.mrb[0].mxu0 %v239
        %v380 = vpop.f32.mrb[0].mxu0
        %v381 = vadd.f32 0.0, %v380
        %v382 = vpop.f32.mrb[0].mxu0
        %383 = vmatprep.mubr.f32.mxu0 0.0
        %384 = vmatmul.mubr.f32.gmra.mrb[0].mxu0 %v242
        %v385 = vpop.f32.mrb[0].mxu0
        %v386 = vadd.f32 0.0, %v385
        %v387 = vpop.f32.mrb[0].mxu0
        %388 = vdwg.mxu0
        %v389 = vadd.f32 %v147, %v311
        %v390 = vadd.f32 %v148, %v316
        %v391 = vadd.f32 %v149, %v321
        %v392 = vadd.f32 %v150, %v326
        %v393 = vadd.f32 %v151, %v331
        %v394 = vadd.f32 %v152, %v336
        %v395 = vadd.f32 %v153, %v341
        %v396 = vadd.f32 %v154, %v346
        %v397 = vadd.f32 %v155, %v351
        %v398 = vadd.f32 %v156, %v356
        %v399 = vadd.f32 %v157, %v361
        %v400 = vadd.f32 %v158, %v366
        %v401 = vadd.f32 %v159, %v371
        %v402 = vadd.f32 %v160, %v376
        %v403 = vadd.f32 %v161, %v381
        %v404 = vadd.f32 %v162, %v386
        %405 = vst [vmem:[#allocation2] sm:$0xff] %v389
        %406 = vst [vmem:[#allocation2 + $0x8] sm:$0xff] %v390
        %407 = vst [vmem:[#allocation2 + $0x10] sm:$0xff] %v391
        %408 = vst [vmem:[#allocation2 + $0x18] sm:$0xff] %v392
        %409 = vst [vmem:[#allocation2 + $0x20] sm:$0xff] %v393
        %410 = vst [vmem:[#allocation2 + $0x28] sm:$0xff] %v394
        %411 = vst [vmem:[#allocation2 + $0x30] sm:$0xff] %v395
        %412 = vst [vmem:[#allocation2 + $0x38] sm:$0xff] %v396
        %413 = vst [vmem:[#allocation2 + $0x40] sm:$0xff] %v397
        %414 = vst [vmem:[#allocation2 + $0x48] sm:$0xff] %v398
        %415 = vst [vmem:[#allocation2 + $0x50] sm:$0xff] %v399
        %416 = vst [vmem:[#allocation2 + $0x58] sm:$0xff] %v400
        %417 = vst [vmem:[#allocation2 + $0x60] sm:$0xff] %v401
        %418 = vst [vmem:[#allocation2 + $0x68] sm:$0xff] %v402
        %419 = vst [vmem:[#allocation2 + $0x70] sm:$0xff] %v403
        %420 = vst [vmem:[#allocation2 + $0x78] sm:$0xff] %v404
        %v421 = vld [vmem:[#allocation3] sm:$0x1]
        %v422 = vadd.f32 %v145, %v146
        %v423 = vrot.slane %v422, 4
        %v424 = vadd.f32 %v422, %v423
        %v425 = vrot.slane %v424, 2
        %v426 = vadd.f32 %v424, %v425
        %v427 = vrot.slane %v426, 1
        %v428 = vadd.f32 %v426, %v427
        %v429 = vadd.f32 %v421, %v428
        %430 = vst [vmem:[#allocation3] sm:$0x1] %v429
        %p431 = scmp.eq.s32.totalorder %s16, 3
        // Predicated region
        $region33: #{tpu_custom_call.1} parent=23 // pred_check
          %p432 = pneg %p431
        $region34: #{tpu_custom_call.1} parent=23 // pred_check_branch
          %434 = sbr.rel (%p432) target = $region36
        $region35: #{tpu_custom_call.1} parent=23 // pred_region
          %v435 = vld [vmem:[#allocation3] sm:$0x1]
          %v436 = vmul.f32 %v435, 0.015625
          %v437 = vld [vmem:[#allocation2] sm:$0xff]
          %v438 = vld [vmem:[#allocation2 + $0x8] sm:$0xff]
          %v439 = vld [vmem:[#allocation2 + $0x10] sm:$0xff]
          %v440 = vld [vmem:[#allocation2 + $0x18] sm:$0xff]
          %v441 = vld [vmem:[#allocation2 + $0x20] sm:$0xff]
          %v442 = vld [vmem:[#allocation2 + $0x28] sm:$0xff]
          %v443 = vld [vmem:[#allocation2 + $0x30] sm:$0xff]
          %v444 = vld [vmem:[#allocation2 + $0x38] sm:$0xff]
          %v445 = vld [vmem:[#allocation2 + $0x40] sm:$0xff]
          %v446 = vld [vmem:[#allocation2 + $0x48] sm:$0xff]
          %v447 = vld [vmem:[#allocation2 + $0x50] sm:$0xff]
          %v448 = vld [vmem:[#allocation2 + $0x58] sm:$0xff]
          %v449 = vld [vmem:[#allocation2 + $0x60] sm:$0xff]
          %v450 = vld [vmem:[#allocation2 + $0x68] sm:$0xff]
          %v451 = vld [vmem:[#allocation2 + $0x70] sm:$0xff]
          %v452 = vld [vmem:[#allocation2 + $0x78] sm:$0xff]
          %v453 = vlaneseq
          %v454 = vshrl.u32 %v453, 7
          %v455 = vadd.s32 %v454, 8
          %v456 = vadd.s32 %v454, 16
          %v457 = vadd.s32 %v454, 24
          %v458 = vadd.s32 %v454, 32
          %v459 = vadd.s32 %v454, 40
          %v460 = vadd.s32 %v454, 48
          %v461 = vadd.s32 %v454, 56
          %v462 = vadd.s32 %v454, 64
          %v463 = vadd.s32 %v454, 72
          %v464 = vadd.s32 %v454, 80
          %v465 = vadd.s32 %v454, 88
          %v466 = vadd.s32 %v454, 96
          %v467 = vadd.s32 %v454, 104
          %v468 = vadd.s32 %v454, 112
          %v469 = vadd.s32 %v454, 120
          %v470 = vstv 0
          %v471 = vadd.s32 %v470, %v454
          %v472 = vadd.s32 %v470, %v455
          %v473 = vadd.s32 %v470, %v456
          %v474 = vadd.s32 %v470, %v457
          %v475 = vadd.s32 %v470, %v458
          %v476 = vadd.s32 %v470, %v459
          %v477 = vadd.s32 %v470, %v460
          %v478 = vadd.s32 %v470, %v461
          %v479 = vadd.s32 %v470, %v462
          %v480 = vadd.s32 %v470, %v463
          %v481 = vadd.s32 %v470, %v464
          %v482 = vadd.s32 %v470, %v465
          %v483 = vadd.s32 %v470, %v466
          %v484 = vadd.s32 %v470, %v467
          %v485 = vadd.s32 %v470, %v468
          %v486 = vadd.s32 %v470, %v469
          %v487 = vlaneseq
          %v488 = vand.u32 %v487, 127
          %vm489 = vcmp.eq.s32.totalorder %v471, %v488
          %vm490 = vcmp.eq.s32.totalorder %v472, %v488
          %vm491 = vcmp.eq.s32.totalorder %v473, %v488
          %vm492 = vcmp.eq.s32.totalorder %v474, %v488
          %vm493 = vcmp.eq.s32.totalorder %v475, %v488
          %vm494 = vcmp.eq.s32.totalorder %v476, %v488
          %vm495 = vcmp.eq.s32.totalorder %v477, %v488
          %vm496 = vcmp.eq.s32.totalorder %v478, %v488
          %vm497 = vcmp.eq.s32.totalorder %v479, %v488
          %vm498 = vcmp.eq.s32.totalorder %v480, %v488
          %vm499 = vcmp.eq.s32.totalorder %v481, %v488
          %vm500 = vcmp.eq.s32.totalorder %v482, %v488
          %vm501 = vcmp.eq.s32.totalorder %v483, %v488
          %vm502 = vcmp.eq.s32.totalorder %v484, %v488
          %vm503 = vcmp.eq.s32.totalorder %v485, %v488
          %vm504 = vcmp.eq.s32.totalorder %v486, %v488
          %v505 = vsel %vm489, %v437, 0.0
          %v506 = vsel %vm490, %v438, 0.0
          %v507 = vsel %vm491, %v439, 0.0
          %v508 = vsel %vm492, %v440, 0.0
          %v509 = vsel %vm493, %v441, 0.0
          %v510 = vsel %vm494, %v442, 0.0
          %v511 = vsel %vm495, %v443, 0.0
          %v512 = vsel %vm496, %v444, 0.0
          %v513 = vsel %vm497, %v445, 0.0
          %v514 = vsel %vm498, %v446, 0.0
          %v515 = vsel %vm499, %v447, 0.0
          %v516 = vsel %vm500, %v448, 0.0
          %v517 = vsel %vm501, %v449, 0.0
          %v518 = vsel %vm502, %v450, 0.0
          %v519 = vsel %vm503, %v451, 0.0
          %v520 = vsel %vm504, %v452, 0.0
          %v521 = vadd.f32 %v505, %v506
          %v522 = vadd.f32 %v521, %v507
          %v523 = vadd.f32 %v522, %v508
          %v524 = vadd.f32 %v523, %v509
          %v525 = vadd.f32 %v524, %v510
          %v526 = vadd.f32 %v525, %v511
          %v527 = vadd.f32 %v526, %v512
          %v528 = vadd.f32 %v527, %v513
          %v529 = vadd.f32 %v528, %v514
          %v530 = vadd.f32 %v529, %v515
          %v531 = vadd.f32 %v530, %v516
          %v532 = vadd.f32 %v531, %v517
          %v533 = vadd.f32 %v532, %v518
          %v534 = vadd.f32 %v533, %v519
          %v535 = vadd.f32 %v534, %v520
          %v536 = vrot.slane %v535, 4
          %v537 = vadd.f32 %v535, %v536
          %v538 = vrot.slane %v537, 2
          %v539 = vadd.f32 %v537, %v538
          %v540 = vrot.slane %v539, 1
          %v541 = vadd.f32 %v539, %v540
          %v542 = vadd.f32 %v541, 0.0
          %v543 = vmul.f32 %v436, 64.0
          %v544 = vmul.f32 %v543, %v436
          %v545 = vsub.f32 %v542, %v544
          %v546 = vmul.f32 %v545, 0.015873017
          %v547 = vadd.f32 %v546, 1e-08
          %v548 = vrsqrt.pop %v547
          %549 = vxpose.xlu0.b32.start [1/16] %v436, 128
          %550 = vxpose.xlu0.b32.cont [2/16] 0.0, 128
          %551 = vxpose.xlu0.b32.cont [3/16] 0.0, 128
          %552 = vxpose.xlu0.b32.cont [4/16] 0.0, 128
          %553 = vxpose.xlu0.b32.cont [5/16] 0.0, 128
          %554 = vxpose.xlu0.b32.cont [6/16] 0.0, 128
          %555 = vxpose.xlu0.b32.cont [7/16] 0.0, 128
          %556 = vxpose.xlu0.b32.cont [8/16] 0.0, 128
          %557 = vxpose.xlu0.b32.cont [9/16] 0.0, 128
          %558 = vxpose.xlu0.b32.cont [10/16] 0.0, 128
          %559 = vxpose.xlu0.b32.cont [11/16] 0.0, 128
          %560 = vxpose.xlu0.b32.cont [12/16] 0.0, 128
          %561 = vxpose.xlu0.b32.cont [13/16] 0.0, 128
          %562 = vxpose.xlu0.b32.cont [14/16] 0.0, 128
          %563 = vxpose.xlu0.b32.cont [15/16] 0.0, 128
          %564 = vxpose.xlu0.b32.end [16/16] 0.0, 128
          %v565 = vpop.trf.xlu0
          %v566 = vpop.trf.xlu0
          %v567 = vpop.trf.xlu0
          %v568 = vpop.trf.xlu0
          %v569 = vpop.trf.xlu0
          %v570 = vpop.trf.xlu0
          %v571 = vpop.trf.xlu0
          %v572 = vpop.trf.xlu0
          %v573 = vpop.trf.xlu0
          %v574 = vpop.trf.xlu0
          %v575 = vpop.trf.xlu0
          %v576 = vpop.trf.xlu0
          %v577 = vpop.trf.xlu0
          %v578 = vpop.trf.xlu0
          %v579 = vpop.trf.xlu0
          %v580 = vpop.trf.xlu0
          %vm581 = vcmask 7168
          %582 = vst.msk [vmem:[#allocation4] sm:$0xff] %vm581, %v565
          %583 = vst.msk [vmem:[#allocation4 + $0x8] sm:$0xff] %vm581, %v566
          %584 = vst.msk [vmem:[#allocation4 + $0x10] sm:$0xff] %vm581, %v567
          %585 = vst.msk [vmem:[#allocation4 + $0x18] sm:$0xff] %vm581, %v568
          %586 = vst.msk [vmem:[#allocation4 + $0x20] sm:$0xff] %vm581, %v569
          %587 = vst.msk [vmem:[#allocation4 + $0x28] sm:$0xff] %vm581, %v570
          %588 = vst.msk [vmem:[#allocation4 + $0x30] sm:$0xff] %vm581, %v571
          %589 = vst.msk [vmem:[#allocation4 + $0x38] sm:$0xff] %vm581, %v572
          %590 = vst.msk [vmem:[#allocation4 + $0x40] sm:$0xff] %vm581, %v573
          %591 = vst.msk [vmem:[#allocation4 + $0x48] sm:$0xff] %vm581, %v574
          %592 = vst.msk [vmem:[#allocation4 + $0x50] sm:$0xff] %vm581, %v575
          %593 = vst.msk [vmem:[#allocation4 + $0x58] sm:$0xff] %vm581, %v576
          %594 = vst.msk [vmem:[#allocation4 + $0x60] sm:$0xff] %vm581, %v577
          %595 = vst.msk [vmem:[#allocation4 + $0x68] sm:$0xff] %vm581, %v578
          %596 = vst.msk [vmem:[#allocation4 + $0x70] sm:$0xff] %vm581, %v579
          %597 = vst.msk [vmem:[#allocation4 + $0x78] sm:$0xff] %vm581, %v580
          %598 = vxpose.xlu0.b32.start [1/16] %v548, 128
          %599 = vxpose.xlu0.b32.cont [2/16] 0.0, 128
          %600 = vxpose.xlu0.b32.cont [3/16] 0.0, 128
          %601 = vxpose.xlu0.b32.cont [4/16] 0.0, 128
          %602 = vxpose.xlu0.b32.cont [5/16] 0.0, 128
          %603 = vxpose.xlu0.b32.cont [6/16] 0.0, 128
          %604 = vxpose.xlu0.b32.cont [7/16] 0.0, 128
          %605 = vxpose.xlu0.b32.cont [8/16] 0.0, 128
          %606 = vxpose.xlu0.b32.cont [9/16] 0.0, 128
          %607 = vxpose.xlu0.b32.cont [10/16] 0.0, 128
          %608 = vxpose.xlu0.b32.cont [11/16] 0.0, 128
          %609 = vxpose.xlu0.b32.cont [12/16] 0.0, 128
          %610 = vxpose.xlu0.b32.cont [13/16] 0.0, 128
          %611 = vxpose.xlu0.b32.cont [14/16] 0.0, 128
          %612 = vxpose.xlu0.b32.cont [15/16] 0.0, 128
          %613 = vxpose.xlu0.b32.end [16/16] 0.0, 128
          %v614 = vpop.trf.xlu0
          %v615 = vpop.trf.xlu0
          %v616 = vpop.trf.xlu0
          %v617 = vpop.trf.xlu0
          %v618 = vpop.trf.xlu0
          %v619 = vpop.trf.xlu0
          %v620 = vpop.trf.xlu0
          %v621 = vpop.trf.xlu0
          %v622 = vpop.trf.xlu0
          %v623 = vpop.trf.xlu0
          %v624 = vpop.trf.xlu0
          %v625 = vpop.trf.xlu0
          %v626 = vpop.trf.xlu0
          %v627 = vpop.trf.xlu0
          %v628 = vpop.trf.xlu0
          %v629 = vpop.trf.xlu0
          %630 = vst.msk [vmem:[#allocation5] sm:$0xff] %vm581, %v614
          %631 = vst.msk [vmem:[#allocation5 + $0x8] sm:$0xff] %vm581, %v615
          %632 = vst.msk [vmem:[#allocation5 + $0x10] sm:$0xff] %vm581, %v616
          %633 = vst.msk [vmem:[#allocation5 + $0x18] sm:$0xff] %vm581, %v617
          %634 = vst.msk [vmem:[#allocation5 + $0x20] sm:$0xff] %vm581, %v618
          %635 = vst.msk [vmem:[#allocation5 + $0x28] sm:$0xff] %vm581, %v619
          %636 = vst.msk [vmem:[#allocation5 + $0x30] sm:$0xff] %vm581, %v620
          %637 = vst.msk [vmem:[#allocation5 + $0x38] sm:$0xff] %vm581, %v621
          %638 = vst.msk [vmem:[#allocation5 + $0x40] sm:$0xff] %vm581, %v622
          %639 = vst.msk [vmem:[#allocation5 + $0x48] sm:$0xff] %vm581, %v623
          %640 = vst.msk [vmem:[#allocation5 + $0x50] sm:$0xff] %vm581, %v624
          %641 = vst.msk [vmem:[#allocation5 + $0x58] sm:$0xff] %vm581, %v625
          %642 = vst.msk [vmem:[#allocation5 + $0x60] sm:$0xff] %vm581, %v626
          %643 = vst.msk [vmem:[#allocation5 + $0x68] sm:$0xff] %vm581, %v627
          %644 = vst.msk [vmem:[#allocation5 + $0x70] sm:$0xff] %vm581, %v628
          %645 = vst.msk [vmem:[#allocation5 + $0x78] sm:$0xff] %vm581, %v629
          %v646 = vld [vmem:[#allocation2] sm:$0xff]
          %v647 = vld [vmem:[#allocation2 + $0x8] sm:$0xff]
          %v648 = vld [vmem:[#allocation2 + $0x10] sm:$0xff]
          %v649 = vld [vmem:[#allocation2 + $0x18] sm:$0xff]
          %v650 = vld [vmem:[#allocation2 + $0x20] sm:$0xff]
          %v651 = vld [vmem:[#allocation2 + $0x28] sm:$0xff]
          %v652 = vld [vmem:[#allocation2 + $0x30] sm:$0xff]
          %v653 = vld [vmem:[#allocation2 + $0x38] sm:$0xff]
          %v654 = vld [vmem:[#allocation2 + $0x40] sm:$0xff]
          %v655 = vld [vmem:[#allocation2 + $0x48] sm:$0xff]
          %v656 = vld [vmem:[#allocation2 + $0x50] sm:$0xff]
          %v657 = vld [vmem:[#allocation2 + $0x58] sm:$0xff]
          %v658 = vld [vmem:[#allocation2 + $0x60] sm:$0xff]
          %v659 = vld [vmem:[#allocation2 + $0x68] sm:$0xff]
          %v660 = vld [vmem:[#allocation2 + $0x70] sm:$0xff]
          %v661 = vld [vmem:[#allocation2 + $0x78] sm:$0xff]
          %v662 = vld [vmem:[#allocation4] sm:$0xff]
          %v663 = vld [vmem:[#allocation4 + $0x8] sm:$0xff]
          %v664 = vld [vmem:[#allocation4 + $0x10] sm:$0xff]
          %v665 = vld [vmem:[#allocation4 + $0x18] sm:$0xff]
          %v666 = vld [vmem:[#allocation4 + $0x20] sm:$0xff]
          %v667 = vld [vmem:[#allocation4 + $0x28] sm:$0xff]
          %v668 = vld [vmem:[#allocation4 + $0x30] sm:$0xff]
          %v669 = vld [vmem:[#allocation4 + $0x38] sm:$0xff]
          %v670 = vld [vmem:[#allocation4 + $0x40] sm:$0xff]
          %v671 = vld [vmem:[#allocation4 + $0x48] sm:$0xff]
          %v672 = vld [vmem:[#allocation4 + $0x50] sm:$0xff]
          %v673 = vld [vmem:[#allocation4 + $0x58] sm:$0xff]
          %v674 = vld [vmem:[#allocation4 + $0x60] sm:$0xff]
          %v675 = vld [vmem:[#allocation4 + $0x68] sm:$0xff]
          %v676 = vld [vmem:[#allocation4 + $0x70] sm:$0xff]
          %v677 = vld [vmem:[#allocation4 + $0x78] sm:$0xff]
          %v678 = vld [vmem:[#allocation5] sm:$0xff]
          %v679 = vld [vmem:[#allocation5 + $0x8] sm:$0xff]
          %v680 = vld [vmem:[#allocation5 + $0x10] sm:$0xff]
          %v681 = vld [vmem:[#allocation5 + $0x18] sm:$0xff]
          %v682 = vld [vmem:[#allocation5 + $0x20] sm:$0xff]
          %v683 = vld [vmem:[#allocation5 + $0x28] sm:$0xff]
          %v684 = vld [vmem:[#allocation5 + $0x30] sm:$0xff]
          %v685 = vld [vmem:[#allocation5 + $0x38] sm:$0xff]
          %v686 = vld [vmem:[#allocation5 + $0x40] sm:$0xff]
          %v687 = vld [vmem:[#allocation5 + $0x48] sm:$0xff]
          %v688 = vld [vmem:[#allocation5 + $0x50] sm:$0xff]
          %v689 = vld [vmem:[#allocation5 + $0x58] sm:$0xff]
          %v690 = vld [vmem:[#allocation5 + $0x60] sm:$0xff]
          %v691 = vld [vmem:[#allocation5 + $0x68] sm:$0xff]
          %v692 = vld [vmem:[#allocation5 + $0x70] sm:$0xff]
          %v693 = vld [vmem:[#allocation5 + $0x78] sm:$0xff]
          %695 = vset.pattern.permute.xlu0 0
          %696 = vperm.xlu0 %695, %v662
          %v697 = vpop.permute.xlu0 %696
          %700 = vset.pattern.permute.xlu0 0
          %701 = vperm.xlu0 %700, %v663
          %v702 = vpop.permute.xlu0 %701
          %705 = vset.pattern.permute.xlu0 0
          %706 = vperm.xlu0 %705, %v664
          %v707 = vpop.permute.xlu0 %706
          %710 = vset.pattern.permute.xlu0 0
          %711 = vperm.xlu0 %710, %v665
          %v712 = vpop.permute.xlu0 %711
          %715 = vset.pattern.permute.xlu0 0
          %716 = vperm.xlu0 %715, %v666
          %v717 = vpop.permute.xlu0 %716
          %720 = vset.pattern.permute.xlu0 0
          %721 = vperm.xlu0 %720, %v667
          %v722 = vpop.permute.xlu0 %721
          %725 = vset.pattern.permute.xlu0 0
          %726 = vperm.xlu0 %725, %v668
          %v727 = vpop.permute.xlu0 %726
          %730 = vset.pattern.permute.xlu0 0
          %731 = vperm.xlu0 %730, %v669
          %v732 = vpop.permute.xlu0 %731
          %735 = vset.pattern.permute.xlu0 0
          %736 = vperm.xlu0 %735, %v670
          %v737 = vpop.permute.xlu0 %736
          %740 = vset.pattern.permute.xlu0 0
          %741 = vperm.xlu0 %740, %v671
          %v742 = vpop.permute.xlu0 %741
          %745 = vset.pattern.permute.xlu0 0
          %746 = vperm.xlu0 %745, %v672
          %v747 = vpop.permute.xlu0 %746
          %750 = vset.pattern.permute.xlu0 0
          %751 = vperm.xlu0 %750, %v673
          %v752 = vpop.permute.xlu0 %751
          %755 = vset.pattern.permute.xlu0 0
          %756 = vperm.xlu0 %755, %v674
          %v757 = vpop.permute.xlu0 %756
          %760 = vset.pattern.permute.xlu0 0
          %761 = vperm.xlu0 %760, %v675
          %v762 = vpop.permute.xlu0 %761
          %765 = vset.pattern.permute.xlu0 0
          %766 = vperm.xlu0 %765, %v676
          %v767 = vpop.permute.xlu0 %766
          %770 = vset.pattern.permute.xlu0 0
          %771 = vperm.xlu0 %770, %v677
          %v772 = vpop.permute.xlu0 %771
          %v775 = vlaneseq
          %v776 = vshrl.u32 %v775, 7
          %v777 = vsub.s32 0, %v776
          %v778 = vrot.slane %v436, %v777
          %v780 = vmul.f32 %v697, %v778
          %v781 = vmul.f32 %v702, %v778
          %v782 = vmul.f32 %v707, %v778
          %v783 = vmul.f32 %v712, %v778
          %v784 = vmul.f32 %v717, %v778
          %v785 = vmul.f32 %v722, %v778
          %v786 = vmul.f32 %v727, %v778
          %v787 = vmul.f32 %v732, %v778
          %v788 = vmul.f32 %v737, %v778
          %v789 = vmul.f32 %v742, %v778
          %v790 = vmul.f32 %v747, %v778
          %v791 = vmul.f32 %v752, %v778
          %v792 = vmul.f32 %v757, %v778
          %v793 = vmul.f32 %v762, %v778
          %v794 = vmul.f32 %v767, %v778
          %v795 = vmul.f32 %v772, %v778
          %v796 = vmul.f32 %v780, 64.0
          %v797 = vmul.f32 %v781, 64.0
          %v798 = vmul.f32 %v782, 64.0
          %v799 = vmul.f32 %v783, 64.0
          %v800 = vmul.f32 %v784, 64.0
          %v801 = vmul.f32 %v785, 64.0
          %v802 = vmul.f32 %v786, 64.0
          %v803 = vmul.f32 %v787, 64.0
          %v804 = vmul.f32 %v788, 64.0
          %v805 = vmul.f32 %v789, 64.0
          %v806 = vmul.f32 %v790, 64.0
          %v807 = vmul.f32 %v791, 64.0
          %v808 = vmul.f32 %v792, 64.0
          %v809 = vmul.f32 %v793, 64.0
          %v810 = vmul.f32 %v794, 64.0
          %v811 = vmul.f32 %v795, 64.0
          %v812 = vsub.f32 %v646, %v796
          %v813 = vsub.f32 %v647, %v797
          %v814 = vsub.f32 %v648, %v798
          %v815 = vsub.f32 %v649, %v799
          %v816 = vsub.f32 %v650, %v800
          %v817 = vsub.f32 %v651, %v801
          %v818 = vsub.f32 %v652, %v802
          %v819 = vsub.f32 %v653, %v803
          %v820 = vsub.f32 %v654, %v804
          %v821 = vsub.f32 %v655, %v805
          %v822 = vsub.f32 %v656, %v806
          %v823 = vsub.f32 %v657, %v807
          %v824 = vsub.f32 %v658, %v808
          %v825 = vsub.f32 %v659, %v809
          %v826 = vsub.f32 %v660, %v810
          %v827 = vsub.f32 %v661, %v811
          %829 = vset.pattern.permute.xlu0 0
          %830 = vperm.xlu0 %829, %v678
          %v831 = vpop.permute.xlu0 %830
          %834 = vset.pattern.permute.xlu0 0
          %835 = vperm.xlu0 %834, %v679
          %v836 = vpop.permute.xlu0 %835
          %839 = vset.pattern.permute.xlu0 0
          %840 = vperm.xlu0 %839, %v680
          %v841 = vpop.permute.xlu0 %840
          %844 = vset.pattern.permute.xlu0 0
          %845 = vperm.xlu0 %844, %v681
          %v846 = vpop.permute.xlu0 %845
          %849 = vset.pattern.permute.xlu0 0
          %850 = vperm.xlu0 %849, %v682
          %v851 = vpop.permute.xlu0 %850
          %854 = vset.pattern.permute.xlu0 0
          %855 = vperm.xlu0 %854, %v683
          %v856 = vpop.permute.xlu0 %855
          %859 = vset.pattern.permute.xlu0 0
          %860 = vperm.xlu0 %859, %v684
          %v861 = vpop.permute.xlu0 %860
          %864 = vset.pattern.permute.xlu0 0
          %865 = vperm.xlu0 %864, %v685
          %v866 = vpop.permute.xlu0 %865
          %869 = vset.pattern.permute.xlu0 0
          %870 = vperm.xlu0 %869, %v686
          %v871 = vpop.permute.xlu0 %870
          %874 = vset.pattern.permute.xlu0 0
          %875 = vperm.xlu0 %874, %v687
          %v876 = vpop.permute.xlu0 %875
          %879 = vset.pattern.permute.xlu0 0
          %880 = vperm.xlu0 %879, %v688
          %v881 = vpop.permute.xlu0 %880
          %884 = vset.pattern.permute.xlu0 0
          %885 = vperm.xlu0 %884, %v689
          %v886 = vpop.permute.xlu0 %885
          %889 = vset.pattern.permute.xlu0 0
          %890 = vperm.xlu0 %889, %v690
          %v891 = vpop.permute.xlu0 %890
          %894 = vset.pattern.permute.xlu0 0
          %895 = vperm.xlu0 %894, %v691
          %v896 = vpop.permute.xlu0 %895
          %899 = vset.pattern.permute.xlu0 0
          %900 = vperm.xlu0 %899, %v692
          %v901 = vpop.permute.xlu0 %900
          %904 = vset.pattern.permute.xlu0 0
          %905 = vperm.xlu0 %904, %v693
          %v906 = vpop.permute.xlu0 %905
          %v908 = vlaneseq
          %v909 = vshrl.u32 %v908, 7
          %v910 = vsub.s32 0, %v909
          %v911 = vrot.slane %v548, %v910
          %v912 = vmul.f32 %v831, %v911
          %v913 = vmul.f32 %v836, %v911
          %v914 = vmul.f32 %v841, %v911
          %v915 = vmul.f32 %v846, %v911
          %v916 = vmul.f32 %v851, %v911
          %v917 = vmul.f32 %v856, %v911
          %v918 = vmul.f32 %v861, %v911
          %v919 = vmul.f32 %v866, %v911
          %v920 = vmul.f32 %v871, %v911
          %v921 = vmul.f32 %v876, %v911
          %v922 = vmul.f32 %v881, %v911
          %v923 = vmul.f32 %v886, %v911
          %v924 = vmul.f32 %v891, %v911
          %v925 = vmul.f32 %v896, %v911
          %v926 = vmul.f32 %v901, %v911
          %v927 = vmul.f32 %v906, %v911
          %v928 = vmul.f32 %v812, %v912
          %v929 = vmul.f32 %v813, %v913
          %v930 = vmul.f32 %v814, %v914
          %v931 = vmul.f32 %v815, %v915
          %v932 = vmul.f32 %v816, %v916
          %v933 = vmul.f32 %v817, %v917
          %v934 = vmul.f32 %v818, %v918
          %v935 = vmul.f32 %v819, %v919
          %v936 = vmul.f32 %v820, %v920
          %v937 = vmul.f32 %v821, %v921
          %v938 = vmul.f32 %v822, %v922
          %v939 = vmul.f32 %v823, %v923
          %v940 = vmul.f32 %v824, %v924
          %v941 = vmul.f32 %v825, %v925
          %v942 = vmul.f32 %v826, %v926
          %v943 = vmul.f32 %v827, %v927
          %v944 = vsel %vm489, 0.0, %v928
          %v945 = vsel %vm490, 0.0, %v929
          %v946 = vsel %vm491, 0.0, %v930
          %v947 = vsel %vm492, 0.0, %v931
          %v948 = vsel %vm493, 0.0, %v932
          %v949 = vsel %vm494, 0.0, %v933
          %v950 = vsel %vm495, 0.0, %v934
          %v951 = vsel %vm496, 0.0, %v935
          %v952 = vsel %vm497, 0.0, %v936
          %v953 = vsel %vm498, 0.0, %v937
          %v954 = vsel %vm499, 0.0, %v938
          %v955 = vsel %vm500, 0.0, %v939
          %v956 = vsel %vm501, 0.0, %v940
          %v957 = vsel %vm502, 0.0, %v941
          %v958 = vsel %vm503, 0.0, %v942
          %v959 = vsel %vm504, 0.0, %v943
          %v960 = vmul.f32 %v944, %v944
          %v961 = vmul.f32 %v945, %v945
          %v962 = vmul.f32 %v946, %v946
          %v963 = vmul.f32 %v947, %v947
          %v964 = vmul.f32 %v948, %v948
          %v965 = vmul.f32 %v949, %v949
          %v966 = vmul.f32 %v950, %v950
          %v967 = vmul.f32 %v951, %v951
          %v968 = vmul.f32 %v952, %v952
          %v969 = vmul.f32 %v953, %v953
          %v970 = vmul.f32 %v954, %v954
          %v971 = vmul.f32 %v955, %v955
          %v972 = vmul.f32 %v956, %v956
          %v973 = vmul.f32 %v957, %v957
          %v974 = vmul.f32 %v958, %v958
          %v975 = vmul.f32 %v959, %v959
          %v976 = vadd.f32 %v960, %v961
          %v977 = vadd.f32 %v976, %v962
          %v978 = vadd.f32 %v977, %v963
          %v979 = vadd.f32 %v978, %v964
          %v980 = vadd.f32 %v979, %v965
          %v981 = vadd.f32 %v980, %v966
          %v982 = vadd.f32 %v981, %v967
          %v983 = vadd.f32 %v982, %v968
          %v984 = vadd.f32 %v983, %v969
          %v985 = vadd.f32 %v984, %v970
          %v986 = vadd.f32 %v985, %v971
          %v987 = vadd.f32 %v986, %v972
          %v988 = vadd.f32 %v987, %v973
          %v989 = vadd.f32 %v988, %v974
          %v990 = vadd.f32 %v989, %v975
          %v991 = vrot.slane %v990, 4
          %v992 = vadd.f32 %v990, %v991
          %v993 = vrot.slane %v992, 2
          %v994 = vadd.f32 %v992, %v993
          %v995 = vrot.slane %v994, 1
          %v996 = vadd.f32 %v994, %v995
          %v997 = vadd.f32 %v996, 0.0
          %vm998 = vcmask 1040384
          %v999 = vsel %vm998, %v997, 0.0
          %1000 = vadd.xlane.f32.xlu0 %v999
          %v1001 = vpop.xlane.xlu0 %1000
          %v1002 = vrot.slane %v1001, 4
          %v1003 = vadd.f32 %v1001, %v1002
          %v1004 = vrot.slane %v1003, 2
          %v1005 = vadd.f32 %v1003, %v1004
          %v1006 = vrot.slane %v1005, 1
          %v1007 = vadd.f32 %v1005, %v1006
          %s1008 = vtos %v1007
          %v1009 = vrcp.pop 16256.0
          %s1010 = vtos %v1009
          %s1011 = smul.f32 %s1008, %s1010
          %v1012 = vrcp.pop 64.0
          %s1013 = vtos %v1012
          %s1014 = smul.f32 %s1011, %s1013
          %s1015 = scalar_lea.smem [#allocation9], 0
          %1016 = sst [smem:[%s1015]] %s1014
        $region36: #{tpu_custom_call.1} parent=23 // pred_fallthru
          _
        // Predicated region
        $region37: #{tpu_custom_call.1} parent=23 // pred_check
          %p1017 = pneg %p55
        $region38: #{tpu_custom_call.1} parent=23 // pred_check_branch
          %1019 = sbr.rel (%p1017) target = $region40
        $region39: #{tpu_custom_call.1} parent=23 // pred_region
          %s1021 = ssub.s32 16, 16
          %1022 = vsyncadd [#allocation8], %s1021
          %1025 = dma.smem_to_hbm [#allocation9], 16, %s1, [#allocation8]
        $region40: #{tpu_custom_call.1} parent=23 // pred_fallthru
          _
        // Predicated region
        $region41: #{tpu_custom_call.1} parent=23 // pred_check
          %p1026 = pneg %p55
        $region42: #{tpu_custom_call.1} parent=23 // pred_check_branch
          %1028 = sbr.rel (%p1026) target = $region44
        $region43: #{tpu_custom_call.1} parent=23 // pred_region
          %1029 = dma.done [#allocation8], 16
        $region44: #{tpu_custom_call.1} parent=23 // pred_fallthru
          _
        %1030 = sfence
      $region24: #{tpu_custom_call.1} parent=5 // pred_fallthru
        _
      %p1031 = scmp.le.s32.totalorder 2, %s11
      // Predicated region
      $region45: #{tpu_custom_call.1} parent=5 // pred_check
        %p1032 = pneg %p1031
      $region46: #{tpu_custom_call.1} parent=5 // pred_check_branch
        %1034 = sbr.rel (%p1032) target = $region48
      $region47: #{tpu_custom_call.1} parent=5 // pred_region
        %s1035 = ssub.s32 %s11, 2
      $region48: #{tpu_custom_call.1} parent=5 // pred_fallthru
        _
    $region6: #{tpu_custom_call.1} parent=1 // loop_footer
      %s15 = sadd.s32 1, %s11
    $region7: #{tpu_custom_call.1} parent=1 // loop_footer_branch
      %10 = sbr.rel target = $region3
    $region8: #{tpu_custom_call.1} parent=1 // loop_exit
      _
    %1036 = vsyncpa [#allocation7], 1
    %s1037 = scalar_lea.sflag [#allocation7], 1
    %1038 = vsyncpa %s1037, 1
    %1039 = vsyncpa [#allocation8], 1
    %s1040 = scalar_lea.sflag [#allocation8], 1
    %1041 = vsyncpa %s1040, 1

</llo_original>
